<compile_context>
chip_gen: v7x
topology: tpu7x:2x2x1
jax: 0.10.0
libtpu: 0.0.40
codegen_flags: <defaults>
</compile_context>

<pallas_src>
import math

import jax
import jax.numpy as jnp
from jax.experimental import pallas as pl
from jax.experimental.pallas import tpu as pltpu

_LANE = 128
_BLOCK_BYTE_TARGET = 2 * 1024 * 1024   # per block; x4 (in+out, 2 bufs) = 8 MiB
_BLOCK_BYTE_MAX = 6 * 1024 * 1024      # hard cap before bailing to plain reshape
_SMALL_BLOCK_BYTES = 1 * 1024 * 1024   # below this, request 3-deep buffering


def _flatten_copy_kernel(x_ref, o_ref):
    # Pure identity copy over a lane-dense (block_rows, lane) tile.
    o_ref[...] = x_ref[...]


def _sublane_pack(itemsize):
    # f32 -> 8, bf16 -> 16, int8/fp8 -> 32 (sub-32-bit dtypes pack along sublanes).
    return max(8, 32 // itemsize)


def _choose_retile(total, pack):
    """Retile the flat buffer as (rows, lane).

    lane is the largest multiple of 128 (<= 4096) dividing `total`, preferring
    a lane width for which rows is a multiple of the dtype sublane packing.
    Returns None if `total` is not a multiple of 128.
    """
    if total % _LANE != 0:
        return None
    best = None
    lane = min(4096, total)
    lane -= lane % _LANE
    while lane >= _LANE:
        if total % lane == 0:
            rows = total // lane
            if best is None:
                best = (rows, lane)
            if rows % pack == 0:
                return (rows, lane)
        lane -= _LANE
    return best


def _choose_block_rows(rows, lane, itemsize, pack):
    """Pick block_rows: byte-budgeted, pack-aligned, and >=2 blocks if possible."""
    if rows % pack != 0:
        # Ragged row count: must take the full extent as one block.
        return rows
    rows_by_budget = max(pack, (_BLOCK_BYTE_TARGET // (lane * itemsize)) // pack * pack)
    br = min(rows, rows_by_budget)
    while br > pack and rows % br != 0:
        br -= pack
    # Guarantee >=2 blocks along the parallel row axis when possible by
    # splitting rows (keeps full-width lane-dense stores; helps v7x 2x TC).
    if rows // br < 2:
        cand = (br // 2) // pack * pack
        while cand >= pack and rows % cand != 0:
            cand -= pack
        if cand >= pack:
            br = cand
    return br


def flatten(x, *, alias_input=False):
    """Equivalent of torch `x.view(-1, prod(x.shape[1:]))`."""
    n = x.shape[0]
    d = math.prod(x.shape[1:]) if x.ndim > 1 else 1
    out_2d = (n, d)

    if alias_input:
        # A contiguous flatten preserves element order; an aliased "copy" would
        # only rewrite identical bytes.  Skip the kernel entirely (saves the
        # full 2x nbytes of HBM traffic).
        return jnp.reshape(x, out_2d)

    total = n * d
    itemsize = jnp.dtype(x.dtype).itemsize
    pack = _sublane_pack(itemsize)

    retile = _choose_retile(total, pack)
    if retile is None:
        # Lane-unaligned element count: the flatten is metadata-only anyway.
        # TODO(synk): add a masked-store tail path if a materialized copy is
        # ever required for 128-unaligned shapes.
        return jnp.reshape(x, out_2d)

    rows, lane = retile
    block_rows = _choose_block_rows(rows, lane, itemsize, pack)
    block_bytes = block_rows * lane * itemsize
    if block_bytes > _BLOCK_BYTE_MAX:
        # A single ragged block would blow the VMEM budget (v7x: 64 MiB phys);
        # fall back to the free reshape rather than risk a resource failure.
        return jnp.reshape(x, out_2d)

    # Metadata-only retile of the flat buffer (decoupled from batch N).
    x_flat = jnp.reshape(x, (rows, lane))
    n_blocks = rows // block_rows
    grid = (n_blocks,)

    # Only request deeper buffering when steps are small AND there is >1 step.
    if n_blocks > 1 and block_bytes < _SMALL_BLOCK_BYTES:
        in_spec = pl.BlockSpec((block_rows, lane), lambda i: (i, 0),
                               pipeline_mode=pl.Buffered(3))
    else:
        in_spec = pl.BlockSpec((block_rows, lane), lambda i: (i, 0))
    out_spec = pl.BlockSpec((block_rows, lane), lambda i: (i, 0))

    cost = pl.CostEstimate(
        flops=0,
        transcendentals=0,
        bytes_accessed=2 * total * itemsize,
    )

    out = pl.pallas_call(
        _flatten_copy_kernel,
        out_shape=jax.ShapeDtypeStruct((rows, lane), x.dtype),
        grid_spec=pltpu.PrefetchScalarGridSpec(
            num_scalar_prefetch=0,
            grid=grid,
            in_specs=[in_spec],
            out_specs=out_spec,
        ),
        compiler_params=pltpu.CompilerParams(
            dimension_semantics=("parallel",),
        ),
        cost_estimate=cost,
    )(x_flat)

    # Final metadata-only reshape to the torch .view(-1, D) result shape.
    return jnp.reshape(out, out_2d)


if __name__ == "__main__":
    key = jax.random.PRNGKey(0)
    x = jax.random.normal(key, (2, 4, 16, 16), dtype=jnp.float32)

    y = flatten(x)
    jax.block_until_ready(y)

    # Reference check against plain JAX reshape (same semantics as torch .view).
    y_ref = jnp.reshape(x, (x.shape[0], -1))
    assert y.shape == (2, 4 * 16 * 16), y.shape
    assert y.dtype == x.dtype
    assert bool(jnp.array_equal(y, y_ref))

    print("KERNEL_OK")
</pallas_src>

<mosaic_0001>
module attributes {stable_mosaic.version = 11 : i64} {
  func.func @_flatten_copy_kernel(%arg0: i32, %arg1: memref<8x256xf32, #tpu.memory_space<vmem>>, %arg2: memref<8x256xf32, #tpu.memory_space<vmem>>) attributes {dimension_semantics = [#tpu.dimension_semantics<parallel>], iteration_bounds = array<i64: 1>, scalar_prefetch = 0 : i64, scratch_operands = 0 : i64, tpu.core_type = #tpu.core_type<tc>, window_params = [{transform_indices = @transform_0, window_bounds = array<i64: 8, 256>}, {transform_indices = @transform_1, window_bounds = array<i64: 8, 256>}]} {
    %c0 = arith.constant 0 : index
    %c0_0 = arith.constant 0 : index
    %0 = vector.load %arg1[%c0, %c0_0] : memref<8x256xf32, #tpu.memory_space<vmem>>, vector<8x256xf32>
    %c0_1 = arith.constant 0 : index
    %c0_2 = arith.constant 0 : index
    %1 = vector.load %arg2[%c0_1, %c0_2] : memref<8x256xf32, #tpu.memory_space<vmem>>, vector<8x256xf32>
    tpu.vector_store %arg2[%c0_1, %c0_2], %0 {strides = array<i32>} : memref<8x256xf32, #tpu.memory_space<vmem>>, vector<8x256xf32>,
    return
  }
  func.func @transform_0(%arg0: i32) -> (i32, i32) {
    %c0_i32 = arith.constant 0 : i32
    %c0_i32_0 = arith.constant 0 : i32
    return %arg0, %c0_i32 : i32, i32
  }
  func.func @transform_1(%arg0: i32) -> (i32, i32) {
    %c0_i32 = arith.constant 0 : i32
    %c0_i32_0 = arith.constant 0 : i32
    return %arg0, %c0_i32 : i32, i32
  }
}

</mosaic_0001>

<llo_original>
// kernel: tpu_custom_call.1
$region0: #{tpu_custom_call.1}
  #allocation0 [shape = 'u32[]', space=smem, size = 0x4, offset = 0x4, fixed_abs, tag = 'smem constant byte address 0x4 - core index']
  #allocation1 [shape = 'u32[144,128]{1,0:T(1,128)}', space=vmem, size = 0x12000, scoped, tag = 'internal scratch']
  %s0 = inlined_call_operand.hbm [shape: f32[8,256], index: 0, kind: input, shape index: {}]
  %s1 = inlined_call_operand.hbm [shape: f32[8,256], index: 1, kind: output, shape index: {}]
  %s2 = sld [smem:[#allocation0]]
  $region18: #{tpu_custom_call.1} parent=0
    _
  %s4 = ssub.s32 1, %s2
  %s5 = scalar_select 0, %s4, %s2
  $region1: #{tpu_custom_call.1} parent=0
    #allocation2 [shape = 'u8[8192]{0}', space=vmem, size = 0x2000, scoped, tag = 'input window, operand 0, single buffered']
    #allocation3 [shape = 's32[1]{0}', space=sflag, size = 0x4, scoped, tag = 'scoped memory for tpu_custom_call.1']
    #allocation4 [shape = 's32[1]{0}', space=sflag, size = 0x4, scoped, tag = 'scoped memory for tpu_custom_call.1']
    #allocation5 [shape = 'u8[8192]{0}', space=vmem, size = 0x2000, scoped, tag = 'output window, operand 0, single buffered']
    %6 = vsyncpa [#allocation3], 0
    %7 = vsyncpa [#allocation4], 0
    // Predicated region
    $region2: #{tpu_custom_call.1} parent=1 // pred_check
      _
    $region3: #{tpu_custom_call.1} parent=1 // pred_check_branch
      %9 = sbr.rel (0) target = $region5
    $region4: #{tpu_custom_call.1} parent=1 // pred_region
      %s11 = ssub.s32 256, 256
      %12 = vsyncadd [#allocation3], %s11
      %s14 = sshll.u32 [#allocation2], 4
      %s15 = int_to_ptr.vmem [resolvable:$true] %s14
      %17 = dma.hbm_to_vmem [thread:$0]  %s0, 256, %s15, [#allocation3]
    $region5: #{tpu_custom_call.1} parent=1 // pred_fallthru
      _
    // Predicated region
    $region6: #{tpu_custom_call.1} parent=1 // pred_check
      _
    $region7: #{tpu_custom_call.1} parent=1 // pred_check_branch
      %19 = sbr.rel (0) target = $region9
    $region8: #{tpu_custom_call.1} parent=1 // pred_region
      %20 = dma.done [#allocation3], 256
    $region9: #{tpu_custom_call.1} parent=1 // pred_fallthru
      _
    %v21 = vld [vmem:[#allocation2] sm:$0xff]
    %v22 = vld [vmem:[#allocation2 + $0x8] sm:$0xff]
    %23 = vst [vmem:[#allocation5] sm:$0xff] %v21
    %24 = vst [vmem:[#allocation5 + $0x8] sm:$0xff] %v22
    // Predicated region
    $region10: #{tpu_custom_call.1} parent=1 // pred_check
      _
    $region11: #{tpu_custom_call.1} parent=1 // pred_check_branch
      %26 = sbr.rel (0) target = $region13
    $region12: #{tpu_custom_call.1} parent=1 // pred_region
      %s28 = ssub.s32 256, 256
      %29 = vsyncadd [#allocation4], %s28
      %s31 = sshll.u32 [#allocation5], 4
      %s32 = int_to_ptr.vmem [resolvable:$true] %s31
      %34 = dma.vmem_to_hbm [thread:$0]  %s32, 256, %s1, [#allocation4]
    $region13: #{tpu_custom_call.1} parent=1 // pred_fallthru
      _
    // Predicated region
    $region14: #{tpu_custom_call.1} parent=1 // pred_check
      _
    $region15: #{tpu_custom_call.1} parent=1 // pred_check_branch
      %36 = sbr.rel (0) target = $region17
    $region16: #{tpu_custom_call.1} parent=1 // pred_region
      %37 = dma.done [#allocation4], 256
    $region17: #{tpu_custom_call.1} parent=1 // pred_fallthru
      _
    %38 = vsyncpa [#allocation3], 1
    %39 = vsyncpa [#allocation4], 1

</llo_original>
